<compile_context>
chip_gen: v7x
topology: tpu7x:2x2x1
jax: 0.10.0
libtpu: 0.0.40
codegen_flags: <defaults>
</compile_context>

<pallas_src>
import functools

import jax
import jax.numpy as jnp
from jax.experimental import pallas as pl
from jax.experimental.pallas import tpu as pltpu


def _bilstm_mean_kernel(x_ref, wblk_ref, whh_ref, b_ref, out_ref, *, seq_len, hidden):
    """x_ref:(tn, T*D) bf16      wblk_ref:(T*D, T*G) bf16 (time-gather + x2 g-scale folded)
    whh_ref:(2H, G) bf16 (block-diag, x2 g-scale folded)   b_ref:(1, T*G) f32
    out_ref:(tn, 2H).  Gate-major interleaved columns per G-block:
    [i_f, i_b, f_f, f_b, g_f, g_b, o_f, o_b]."""
    T, H = seq_len, hidden
    tn = x_ref.shape[0]
    G = 8 * H

    # Single lane-dense MXU pass for the whole input projection; bias folded in
    # once.  gx_all[:, s*G:(s+1)*G] is already the step-s gate input (forward
    # direction uses time s, backward uses time T-1-s -- encoded in W_blk).
    gx_all = jnp.dot(x_ref[...], wblk_ref[...],
                     preferred_element_type=jnp.float32) + b_ref[...]
    whh = whh_ref[...]

    # g-gate columns carry a x2-scaled pre-activation; tanh is recovered from
    # the single full-width sigmoid pass via tanh(z) = 2*sigmoid(2z) - 1.
    lane = jax.lax.broadcasted_iota(jnp.int32, (tn, G), 1)
    g_mask = (lane >= 4 * H) & (lane < 6 * H)

    h = jnp.zeros((tn, 2 * H), jnp.float32)    # [h_fwd | h_bwd]
    c = jnp.zeros((tn, 2 * H), jnp.float32)
    acc = jnp.zeros((tn, 2 * H), jnp.float32)
    for s in range(T):  # T is tiny & static -> unrolled
        gates = gx_all[:, s * G:(s + 1) * G] + jnp.dot(
            h.astype(jnp.bfloat16), whh, preferred_element_type=jnp.float32)
        sg = jax.nn.sigmoid(gates)                     # ONE full-density EUP pass
        gv = jnp.where(g_mask, 2.0 * sg - 1.0, sg)     # tanh for the g columns
        i_g = gv[:, 0 * H:2 * H]
        f_g = gv[:, 2 * H:4 * H]
        g_g = gv[:, 4 * H:6 * H]
        o_g = gv[:, 6 * H:8 * H]
        c = f_g * c + i_g * g_g
        h = o_g * jnp.tanh(c)
        acc = acc + h

    # TODO(synk): if the writeback shows up hot in the bundle dump, emit a
    # lane-dense (tn//4, 4*D) output block and reshape back in the wrapper.
    out_ref[...] = (acc * (1.0 / T)).astype(out_ref.dtype)


def bilstm_mean_pallas(x, w_ih, w_hh, b_ih, b_hh, *, tn=None):
    """x:(N,T,D); w_ih:(2,4H,D); w_hh:(2,4H,H); b_ih,b_hh:(2,4H)  (PyTorch layout,
    gate order i,f,g,o, direction 0=fwd, 1=bwd).  Returns (N, 2H) time-mean."""
    N, T, D = x.shape
    H = w_hh.shape[2]
    assert D == 2 * H
    G = 8 * H
    out_dtype = x.dtype

    def round8(v):
        return max(8, ((v + 7) // 8) * 8)

    # Row tile: single block for small/medium N (no pointless splits on 1-TC
    # v5e/v6e); for large N an even number of balanced blocks so v7x's two
    # TensorCores stay load-balanced under dimension_semantics=("parallel",).
    if tn is None:
        if N <= 512:
            tn = round8(N)
        else:
            blocks = 2 * pl.cdiv(N, 1024)
            tn = round8(pl.cdiv(N, blocks))
    grid = pl.cdiv(N, tn)

    # (N, T, D) -> (N, T*D) is metadata-only; bf16 halves the dominant HBM
    # stream (operands are bf16 inside the MXU anyway).  No wrapper-side pad:
    # the trailing ragged block is safe because rows are independent and
    # out-of-range output rows are never written back.
    x2 = x.reshape(N, T * D).astype(jnp.bfloat16)

    def gate_interleave(w_f, w_b):
        # (4H, X), (4H, X) -> (X, 8H) with columns [i_f,i_b,f_f,f_b,g_f,g_b,o_f,o_b].
        w = jnp.stack([w_f.reshape(4, H, -1), w_b.reshape(4, H, -1)], axis=1)
        return w.reshape(8 * H, -1).T

    # x2 scale on the g-gate columns (tanh recovered from sigmoid in-kernel).
    gscale = jnp.concatenate(
        [jnp.ones((4 * H,), jnp.float32),
         jnp.full((2 * H,), 2.0, jnp.float32),
         jnp.ones((2 * H,), jnp.float32)])[None, :]                         # (1, G)

    z_ih = jnp.zeros_like(w_ih[0])
    wih_f = gate_interleave(w_ih[0], z_ih) * gscale     # (D, G) fwd-gate cols only
    wih_b = gate_interleave(z_ih, w_ih[1]) * gscale     # (D, G) bwd-gate cols only

    # Block-structured input projection weight (T*D, T*G): column block s holds
    # step-s gate inputs (fwd reads x time s, bwd reads x time T-1-s), so the
    # kernel needs no per-step lane-offset slicing and no fwd/bwd select.
    w_blk = jnp.zeros((T * D, T * G), jnp.float32)
    for s in range(T):
        w_blk = w_blk.at[s * D:(s + 1) * D, s * G:(s + 1) * G].add(wih_f)
        w_blk = w_blk.at[(T - 1 - s) * D:(T - s) * D, s * G:(s + 1) * G].add(wih_b)
    w_blk = w_blk.astype(jnp.bfloat16)

    z_hh = jnp.zeros_like(w_hh[0])
    whh_blk = (jnp.concatenate(
        [gate_interleave(w_hh[0], z_hh), gate_interleave(z_hh, w_hh[1])], axis=0)
        * gscale).astype(jnp.bfloat16)                                      # (2H, G)

    b = b_ih + b_hh
    bias = gate_interleave(b[0][:, None], b[1][:, None]) * gscale           # (1, G)
    bias_all = jnp.tile(bias, (1, T)).astype(jnp.float32)                   # (1, T*G)

    kernel = functools.partial(_bilstm_mean_kernel, seq_len=T, hidden=H)
    out = pl.pallas_call(
        kernel,
        out_shape=jax.ShapeDtypeStruct((N, D), out_dtype),
        grid_spec=pltpu.PrefetchScalarGridSpec(
            num_scalar_prefetch=0,
            grid=(grid,),
            in_specs=[
                pl.BlockSpec((tn, T * D), lambda i: (i, 0)),
                # Weights/bias are small & constant across the grid.
                pl.BlockSpec((T * D, T * G), lambda i: (0, 0)),
                pl.BlockSpec((2 * H, G), lambda i: (0, 0)),
                pl.BlockSpec((1, T * G), lambda i: (0, 0)),
            ],
            out_specs=pl.BlockSpec((tn, D), lambda i: (i, 0)),
        ),
        compiler_params=pltpu.CompilerParams(dimension_semantics=("parallel",)),
    )(x2, w_blk, whh_blk, bias_all)
    return out


def bilstm_mean_ref(x, w_ih, w_hh, b_ih, b_hh):
    """Pure-JAX f32 reference of PyTorch bidirectional LSTM + mean over time."""
    N, T, D = x.shape
    H = w_hh.shape[2]
    outs = []
    for d in range(2):
        wih, whh = w_ih[d], w_hh[d]
        bias = b_ih[d] + b_hh[d]
        h = jnp.zeros((N, H), jnp.float32)
        c = jnp.zeros((N, H), jnp.float32)
        acc = jnp.zeros((N, H), jnp.float32)
        order = range(T) if d == 0 else range(T - 1, -1, -1)
        for t in order:
            gates = x[:, t, :] @ wih.T + h @ whh.T + bias
            i_g = jax.nn.sigmoid(gates[:, 0 * H:1 * H])
            f_g = jax.nn.sigmoid(gates[:, 1 * H:2 * H])
            g_g = jnp.tanh(gates[:, 2 * H:3 * H])
            o_g = jax.nn.sigmoid(gates[:, 3 * H:4 * H])
            c = f_g * c + i_g * g_g
            h = o_g * jnp.tanh(c)
            acc = acc + h
        outs.append(acc / T)
    return jnp.concatenate(outs, axis=1)


def init_lstm_params(key, dim):
    """PyTorch-style bidirectional LSTM params, U(-1/sqrt(H), 1/sqrt(H))."""
    H = dim // 2
    k = 1.0 / jnp.sqrt(jnp.float32(H))
    k_wih, k_whh, k_bih, k_bhh = jax.random.split(key, 4)
    return dict(
        w_ih=jax.random.uniform(k_wih, (2, 4 * H, dim), jnp.float32, -k, k),
        w_hh=jax.random.uniform(k_whh, (2, 4 * H, H), jnp.float32, -k, k),
        b_ih=jax.random.uniform(k_bih, (2, 4 * H), jnp.float32, -k, k),
        b_hh=jax.random.uniform(k_bhh, (2, 4 * H), jnp.float32, -k, k),
    )


def encoder_het_content_forward(h_dict, params, dim):
    """JAX/Pallas equivalent of encoder_het_content.forward (graph handle unused)."""
    content_h = {}
    for ntype, feats in h_dict.items():
        # concat all content features along dim 1, then view as (N, -1, dim)
        concate_embed = jnp.concatenate([feats[name] for name in feats], axis=1)
        n = concate_embed.shape[0]
        concate_embed = concate_embed.reshape(n, -1, dim)
        p = params[ntype]
        out_h = bilstm_mean_pallas(
            concate_embed, p["w_ih"], p["w_hh"], p["b_ih"], p["b_hh"]
        )
        content_h[ntype] = jnp.squeeze(out_h)  # mirrors .squeeze() in the reference
    return content_h


if __name__ == "__main__":
    dim = 32
    n_nodes = 16
    ntypes = ["author", "paper"]
    n_feats = {"author": 3, "paper": 2}  # number of content features -> LSTM seq length

    key = jax.random.PRNGKey(0)
    k_data, k_param = jax.random.split(key)

    # build h_dict: {ntype: {feat_name: (N, dim)}}
    h_dict = {}
    for ntype in ntypes:
        feats = {}
        for j in range(n_feats[ntype]):
            k_data, sub = jax.random.split(k_data)
            feats[f"feat{j}"] = jax.random.normal(sub, (n_nodes, dim), jnp.float32)
        h_dict[ntype] = feats

    # deterministic per-node-type LSTM parameters
    params = {}
    for ntype in ntypes:
        k_param, sub = jax.random.split(k_param)
        params[ntype] = init_lstm_params(sub, dim)

    content_h = encoder_het_content_forward(h_dict, params, dim)
    content_h = jax.tree_util.tree_map(jax.block_until_ready, content_h)

    # correctness check against pure-JAX f32 reference of the PyTorch semantics
    # (tolerance loosened for bf16 MXU operands with f32 accumulation).
    for ntype in ntypes:
        x = jnp.concatenate(
            [h_dict[ntype][name] for name in h_dict[ntype]], axis=1
        ).reshape(n_nodes, -1, dim)
        p = params[ntype]
        ref = bilstm_mean_ref(x, p["w_ih"], p["w_hh"], p["b_ih"], p["b_hh"])
        assert content_h[ntype].shape == (n_nodes, dim)
        assert jnp.allclose(content_h[ntype], ref, atol=2e-2, rtol=2e-2)

    print("KERNEL_OK")
</pallas_src>

<mosaic_0001>
module attributes {stable_mosaic.version = 11 : i64} {
  func.func @_bilstm_mean_kernel(%arg0: i32, %arg1: memref<16x96xbf16, #tpu.memory_space<vmem>>, %arg2: memref<96x384xbf16, #tpu.memory_space<vmem>>, %arg3: memref<32x128xbf16, #tpu.memory_space<vmem>>, %arg4: memref<1x384xf32, #tpu.memory_space<vmem>>, %arg5: memref<16x32xf32, #tpu.memory_space<vmem>>) attributes {dimension_semantics = [#tpu.dimension_semantics<parallel>], iteration_bounds = array<i64: 1>, scalar_prefetch = 0 : i64, scratch_operands = 0 : i64, tpu.core_type = #tpu.core_type<tc>, window_params = [{transform_indices = @transform_0, window_bounds = array<i64: 16, 96>}, {pipeline_mode = #tpu.pipeline_mode<synchronous>, transform_indices = @transform_1, window_bounds = array<i64: 96, 384>}, {pipeline_mode = #tpu.pipeline_mode<synchronous>, transform_indices = @transform_2, window_bounds = array<i64: 32, 128>}, {pipeline_mode = #tpu.pipeline_mode<synchronous>, transform_indices = @transform_3, window_bounds = array<i64: 1, 384>}, {transform_indices = @transform_4, window_bounds = array<i64: 16, 32>}]} {
    %c0 = arith.constant 0 : index
    %c0_0 = arith.constant 0 : index
    %0 = vector.load %arg1[%c0, %c0_0] : memref<16x96xbf16, #tpu.memory_space<vmem>>, vector<16x96xbf16>
    %c0_1 = arith.constant 0 : index
    %c0_2 = arith.constant 0 : index
    %1 = vector.load %arg2[%c0_1, %c0_2] : memref<96x384xbf16, #tpu.memory_space<vmem>>, vector<96x384xbf16>
    %cst = arith.constant dense<0.000000e+00> : vector<16x384xf32>
    %2 = tpu.matmul %0, %1, %cst {dimension_numbers = #tpu.dot_dimension_numbers<[1], [0], [0], [1], [0, 0, 1, 1], [], []>} : vector<16x96xbf16>, vector<96x384xbf16>, vector<16x384xf32> -> vector<16x384xf32>
    %c0_3 = arith.constant 0 : index
    %c0_4 = arith.constant 0 : index
    %3 = vector.load %arg4[%c0_3, %c0_4] : memref<1x384xf32, #tpu.memory_space<vmem>>, vector<1x384xf32>
    %4 = vector.broadcast %3 : vector<1x384xf32> to vector<16x384xf32>
    %5 = arith.addf %2, %4 : vector<16x384xf32>
    %c0_5 = arith.constant 0 : index
    %c0_6 = arith.constant 0 : index
    %6 = vector.load %arg3[%c0_5, %c0_6] : memref<32x128xbf16, #tpu.memory_space<vmem>>, vector<32x128xbf16>
    %7 = tpu.iota {dimensions = array<i32: 1>} : vector<16x128xi32>
    %c64_i32 = arith.constant 64 : i32
    %8 = vector.broadcast %c64_i32 : i32 to vector<16x128xi32>
    %9 = arith.cmpi sge, %7, %8 : vector<16x128xi32>
    %c96_i32 = arith.constant 96 : i32
    %10 = vector.broadcast %c96_i32 : i32 to vector<16x128xi32>
    %11 = arith.cmpi slt, %7, %10 : vector<16x128xi32>
    %12 = arith.andi %9, %11 : vector<16x128xi1>
    %cst_7 = arith.constant 0.000000e+00 : f32
    %13 = vector.broadcast %cst_7 : f32 to vector<16x32xf32>
    %cst_8 = arith.constant 0.000000e+00 : f32
    %14 = vector.broadcast %cst_8 : f32 to vector<16x32xf32>
    %cst_9 = arith.constant 0.000000e+00 : f32
    %15 = vector.broadcast %cst_9 : f32 to vector<16x32xf32>
    %16 = vector.extract_strided_slice %5 {offsets = [0, 0], sizes = [16, 128], strides = [1, 1]} : vector<16x384xf32> to vector<16x128xf32>
    %17 = arith.truncf %13 : vector<16x32xf32> to vector<16x32xbf16>
    %cst_10 = arith.constant dense<0.000000e+00> : vector<16x128xf32>
    %18 = tpu.matmul %17, %6, %cst_10 {dimension_numbers = #tpu.dot_dimension_numbers<[1], [0], [0], [1], [0, 0, 1, 1], [], []>} : vector<16x32xbf16>, vector<32x128xbf16>, vector<16x128xf32> -> vector<16x128xf32>
    %19 = arith.addf %16, %18 : vector<16x128xf32>
    %20 = arith.negf %19 : vector<16x128xf32>
    %21 = math.exp %20 : vector<16x128xf32>
    %cst_11 = arith.constant 1.000000e+00 : f32
    %22 = vector.broadcast %cst_11 : f32 to vector<16x128xf32>
    %23 = arith.addf %22, %21 : vector<16x128xf32>
    %24 = arith.divf %22, %23 : vector<16x128xf32>
    %cst_12 = arith.constant 2.000000e+00 : f32
    %25 = vector.broadcast %cst_12 : f32 to vector<16x128xf32>
    %26 = arith.mulf %25, %24 : vector<16x128xf32>
    %cst_13 = arith.constant 1.000000e+00 : f32
    %27 = vector.broadcast %cst_13 : f32 to vector<16x128xf32>
    %28 = arith.subf %26, %27 : vector<16x128xf32>
    %29 = arith.select %12, %28, %24 : vector<16x128xi1>, vector<16x128xf32>
    %30 = vector.extract_strided_slice %29 {offsets = [0, 0], sizes = [16, 32], strides = [1, 1]} : vector<16x128xf32> to vector<16x32xf32>
    %31 = vector.extract_strided_slice %29 {offsets = [0, 32], sizes = [16, 32], strides = [1, 1]} : vector<16x128xf32> to vector<16x32xf32>
    %32 = vector.extract_strided_slice %29 {offsets = [0, 64], sizes = [16, 32], strides = [1, 1]} : vector<16x128xf32> to vector<16x32xf32>
    %33 = vector.extract_strided_slice %29 {offsets = [0, 96], sizes = [16, 32], strides = [1, 1]} : vector<16x128xf32> to vector<16x32xf32>
    %34 = arith.mulf %31, %14 : vector<16x32xf32>
    %35 = arith.mulf %30, %32 : vector<16x32xf32>
    %36 = arith.addf %34, %35 : vector<16x32xf32>
    %37 = math.tanh %36 : vector<16x32xf32>
    %38 = arith.mulf %33, %37 : vector<16x32xf32>
    %39 = arith.addf %15, %38 : vector<16x32xf32>
    %40 = vector.extract_strided_slice %5 {offsets = [0, 128], sizes = [16, 128], strides = [1, 1]} : vector<16x384xf32> to vector<16x128xf32>
    %41 = arith.truncf %38 : vector<16x32xf32> to vector<16x32xbf16>
    %cst_14 = arith.constant dense<0.000000e+00> : vector<16x128xf32>
    %42 = tpu.matmul %41, %6, %cst_14 {dimension_numbers = #tpu.dot_dimension_numbers<[1], [0], [0], [1], [0, 0, 1, 1], [], []>} : vector<16x32xbf16>, vector<32x128xbf16>, vector<16x128xf32> -> vector<16x128xf32>
    %43 = arith.addf %40, %42 : vector<16x128xf32>
    %44 = arith.negf %43 : vector<16x128xf32>
    %45 = math.exp %44 : vector<16x128xf32>
    %cst_15 = arith.constant 1.000000e+00 : f32
    %46 = vector.broadcast %cst_15 : f32 to vector<16x128xf32>
    %47 = arith.addf %46, %45 : vector<16x128xf32>
    %48 = arith.divf %46, %47 : vector<16x128xf32>
    %cst_16 = arith.constant 2.000000e+00 : f32
    %49 = vector.broadcast %cst_16 : f32 to vector<16x128xf32>
    %50 = arith.mulf %49, %48 : vector<16x128xf32>
    %cst_17 = arith.constant 1.000000e+00 : f32
    %51 = vector.broadcast %cst_17 : f32 to vector<16x128xf32>
    %52 = arith.subf %50, %51 : vector<16x128xf32>
    %53 = arith.select %12, %52, %48 : vector<16x128xi1>, vector<16x128xf32>
    %54 = vector.extract_strided_slice %53 {offsets = [0, 0], sizes = [16, 32], strides = [1, 1]} : vector<16x128xf32> to vector<16x32xf32>
    %55 = vector.extract_strided_slice %53 {offsets = [0, 32], sizes = [16, 32], strides = [1, 1]} : vector<16x128xf32> to vector<16x32xf32>
    %56 = vector.extract_strided_slice %53 {offsets = [0, 64], sizes = [16, 32], strides = [1, 1]} : vector<16x128xf32> to vector<16x32xf32>
    %57 = vector.extract_strided_slice %53 {offsets = [0, 96], sizes = [16, 32], strides = [1, 1]} : vector<16x128xf32> to vector<16x32xf32>
    %58 = arith.mulf %55, %36 : vector<16x32xf32>
    %59 = arith.mulf %54, %56 : vector<16x32xf32>
    %60 = arith.addf %58, %59 : vector<16x32xf32>
    %61 = math.tanh %60 : vector<16x32xf32>
    %62 = arith.mulf %57, %61 : vector<16x32xf32>
    %63 = arith.addf %39, %62 : vector<16x32xf32>
    %64 = vector.extract_strided_slice %5 {offsets = [0, 256], sizes = [16, 128], strides = [1, 1]} : vector<16x384xf32> to vector<16x128xf32>
    %65 = arith.truncf %62 : vector<16x32xf32> to vector<16x32xbf16>
    %cst_18 = arith.constant dense<0.000000e+00> : vector<16x128xf32>
    %66 = tpu.matmul %65, %6, %cst_18 {dimension_numbers = #tpu.dot_dimension_numbers<[1], [0], [0], [1], [0, 0, 1, 1], [], []>} : vector<16x32xbf16>, vector<32x128xbf16>, vector<16x128xf32> -> vector<16x128xf32>
    %67 = arith.addf %64, %66 : vector<16x128xf32>
    %68 = arith.negf %67 : vector<16x128xf32>
    %69 = math.exp %68 : vector<16x128xf32>
    %cst_19 = arith.constant 1.000000e+00 : f32
    %70 = vector.broadcast %cst_19 : f32 to vector<16x128xf32>
    %71 = arith.addf %70, %69 : vector<16x128xf32>
    %72 = arith.divf %70, %71 : vector<16x128xf32>
    %cst_20 = arith.constant 2.000000e+00 : f32
    %73 = vector.broadcast %cst_20 : f32 to vector<16x128xf32>
    %74 = arith.mulf %73, %72 : vector<16x128xf32>
    %cst_21 = arith.constant 1.000000e+00 : f32
    %75 = vector.broadcast %cst_21 : f32 to vector<16x128xf32>
    %76 = arith.subf %74, %75 : vector<16x128xf32>
    %77 = arith.select %12, %76, %72 : vector<16x128xi1>, vector<16x128xf32>
    %78 = vector.extract_strided_slice %77 {offsets = [0, 0], sizes = [16, 32], strides = [1, 1]} : vector<16x128xf32> to vector<16x32xf32>
    %79 = vector.extract_strided_slice %77 {offsets = [0, 32], sizes = [16, 32], strides = [1, 1]} : vector<16x128xf32> to vector<16x32xf32>
    %80 = vector.extract_strided_slice %77 {offsets = [0, 64], sizes = [16, 32], strides = [1, 1]} : vector<16x128xf32> to vector<16x32xf32>
    %81 = vector.extract_strided_slice %77 {offsets = [0, 96], sizes = [16, 32], strides = [1, 1]} : vector<16x128xf32> to vector<16x32xf32>
    %82 = arith.mulf %79, %60 : vector<16x32xf32>
    %83 = arith.mulf %78, %80 : vector<16x32xf32>
    %84 = arith.addf %82, %83 : vector<16x32xf32>
    %85 = math.tanh %84 : vector<16x32xf32>
    %86 = arith.mulf %81, %85 : vector<16x32xf32>
    %87 = arith.addf %63, %86 : vector<16x32xf32>
    %cst_22 = arith.constant 0.333333343 : f32
    %88 = vector.broadcast %cst_22 : f32 to vector<16x32xf32>
    %89 = arith.mulf %87, %88 : vector<16x32xf32>
    %c0_23 = arith.constant 0 : index
    %c0_24 = arith.constant 0 : index
    %90 = vector.load %arg5[%c0_23, %c0_24] : memref<16x32xf32, #tpu.memory_space<vmem>>, vector<16x32xf32>
    tpu.vector_store %arg5[%c0_23, %c0_24], %89 {strides = array<i32>} : memref<16x32xf32, #tpu.memory_space<vmem>>, vector<16x32xf32>,
    return
  }
  func.func @transform_0(%arg0: i32) -> (i32, i32) {
    %c0_i32 = arith.constant 0 : i32
    %c0_i32_0 = arith.constant 0 : i32
    return %arg0, %c0_i32 : i32, i32
  }
  func.func @transform_1(%arg0: i32) -> (i32, i32) {
    %c0_i32 = arith.constant 0 : i32
    %c0_i32_0 = arith.constant 0 : i32
    %c0_i32_1 = arith.constant 0 : i32
    return %c0_i32, %c0_i32_0 : i32, i32
  }
  func.func @transform_2(%arg0: i32) -> (i32, i32) {
    %c0_i32 = arith.constant 0 : i32
    %c0_i32_0 = arith.constant 0 : i32
    %c0_i32_1 = arith.constant 0 : i32
    return %c0_i32, %c0_i32_0 : i32, i32
  }
  func.func @transform_3(%arg0: i32) -> (i32, i32) {
    %c0_i32 = arith.constant 0 : i32
    %c0_i32_0 = arith.constant 0 : i32
    %c0_i32_1 = arith.constant 0 : i32
    return %c0_i32, %c0_i32_0 : i32, i32
  }
  func.func @transform_4(%arg0: i32) -> (i32, i32) {
    %c0_i32 = arith.constant 0 : i32
    %c0_i32_0 = arith.constant 0 : i32
    return %arg0, %c0_i32 : i32, i32
  }
}

</mosaic_0001>

<llo_original>
// kernel: tpu_custom_call.1
$region0: #{tpu_custom_call.1}
  #allocation0 [shape = 'u32[]', space=smem, size = 0x4, offset = 0x4, fixed_abs, tag = 'smem constant byte address 0x4 - core index']
  #allocation1 [shape = 'u32[144,128]{1,0:T(1,128)}', space=vmem, size = 0x12000, scoped, tag = 'internal scratch']
  %s0 = inlined_call_operand.hbm [shape: bf16[16,96], index: 0, kind: input, shape index: {}]
  %s1 = inlined_call_operand.hbm [shape: bf16[96,384], index: 1, kind: input, shape index: {}]
  %s2 = inlined_call_operand.hbm [shape: bf16[32,128], index: 2, kind: input, shape index: {}]
  %s3 = inlined_call_operand.vmem [shape: f32[1,384], index: 3, kind: input, shape index: {}]
  %s4 = inlined_call_operand.hbm [shape: f32[16,32], index: 4, kind: output, shape index: {}]
  %s5 = sld [smem:[#allocation0]]
  $region38: #{tpu_custom_call.1} parent=0
    _
  %s7 = ssub.s32 1, %s5
  %s8 = scalar_select 0, %s7, %s5
  $region1: #{tpu_custom_call.1} parent=0
    #allocation2 [shape = 'u8[4096]{0}', space=vmem, size = 0x1000, scoped, tag = 'input window, operand 0, single buffered']
    #allocation3 [shape = 's32[1]{0}', space=sflag, size = 0x4, scoped, tag = 'scoped memory for tpu_custom_call.1']
    #allocation4 [shape = 's32[1]{0}', space=sflag, size = 0x4, scoped, tag = 'scoped memory for tpu_custom_call.1']
    #allocation5 [shape = 'u8[73728]{0}', space=vmem, size = 0x12000, scoped, tag = 'input window, operand 1, single buffered']
    #allocation6 [shape = 's32[1]{0}', space=sflag, size = 0x4, scoped, tag = 'scoped memory for tpu_custom_call.1']
    #allocation7 [shape = 'u8[8192]{0}', space=vmem, size = 0x2000, scoped, tag = 'input window, operand 2, single buffered']
    #allocation8 [shape = 'u8[8192]{0}', space=vmem, size = 0x2000, scoped, tag = 'output window, operand 0, single buffered']
    %9 = vsyncpa [#allocation3], 0
    %10 = vsyncpa [#allocation6], 0
    %11 = vsyncpa [#allocation4], 0
    // Predicated region
    $region2: #{tpu_custom_call.1} parent=1 // pred_check
      _
    $region3: #{tpu_custom_call.1} parent=1 // pred_check_branch
      %13 = sbr.rel (0) target = $region5
    $region4: #{tpu_custom_call.1} parent=1 // pred_region
      %s15 = ssub.s32 128, 128
      %16 = vsyncadd [#allocation3], %s15
      %s17 = sshll.u32 [#allocation2], 4
      %s18 = int_to_ptr.vmem [resolvable:$true] %s17
      %23 = dma.hbm_to_vmem [thread:$0]  %s0, 128, %s18, [#allocation3], 64, 64, 4
    $region5: #{tpu_custom_call.1} parent=1 // pred_fallthru
      _
    // Predicated region
    $region6: #{tpu_custom_call.1} parent=1 // pred_check
      _
    $region7: #{tpu_custom_call.1} parent=1 // pred_check_branch
      %25 = sbr.rel (0) target = $region9
    $region8: #{tpu_custom_call.1} parent=1 // pred_region
      %s27 = ssub.s32 2304, 2304
      %28 = vsyncadd [#allocation6], %s27
      %s29 = sshll.u32 [#allocation5], 4
      %s30 = int_to_ptr.vmem [resolvable:$true] %s29
      %35 = dma.hbm_to_vmem [thread:$0]  %s1, 2304, %s30, [#allocation6], 192, 192, 12
    $region9: #{tpu_custom_call.1} parent=1 // pred_fallthru
      _
    // Predicated region
    $region10: #{tpu_custom_call.1} parent=1 // pred_check
      _
    $region11: #{tpu_custom_call.1} parent=1 // pred_check_branch
      %37 = sbr.rel (0) target = $region13
    $region12: #{tpu_custom_call.1} parent=1 // pred_region
      %s39 = ssub.s32 256, 256
      %40 = vsyncadd [#allocation6], %s39
      %s41 = sshll.u32 [#allocation7], 4
      %s42 = int_to_ptr.vmem [resolvable:$true] %s41
      %47 = dma.hbm_to_vmem [thread:$0]  %s2, 256, %s42, [#allocation6], 64, 64, 4
    $region13: #{tpu_custom_call.1} parent=1 // pred_fallthru
      _
    // Predicated region
    $region14: #{tpu_custom_call.1} parent=1 // pred_check
      _
    $region15: #{tpu_custom_call.1} parent=1 // pred_check_branch
      %49 = sbr.rel (0) target = $region17
    $region16: #{tpu_custom_call.1} parent=1 // pred_region
      _
    $region17: #{tpu_custom_call.1} parent=1 // pred_fallthru
      _
    // Predicated region
    $region18: #{tpu_custom_call.1} parent=1 // pred_check
      _
    $region19: #{tpu_custom_call.1} parent=1 // pred_check_branch
      %51 = sbr.rel (0) target = $region21
    $region20: #{tpu_custom_call.1} parent=1 // pred_region
      %52 = dma.done [#allocation3], 128
    $region21: #{tpu_custom_call.1} parent=1 // pred_fallthru
      _
    // Predicated region
    $region22: #{tpu_custom_call.1} parent=1 // pred_check
      _
    $region23: #{tpu_custom_call.1} parent=1 // pred_check_branch
      %54 = sbr.rel (0) target = $region25
    $region24: #{tpu_custom_call.1} parent=1 // pred_region
      %55 = dma.done [#allocation6], 2304
    $region25: #{tpu_custom_call.1} parent=1 // pred_fallthru
      _
    // Predicated region
    $region26: #{tpu_custom_call.1} parent=1 // pred_check
      _
    $region27: #{tpu_custom_call.1} parent=1 // pred_check_branch
      %57 = sbr.rel (0) target = $region29
    $region28: #{tpu_custom_call.1} parent=1 // pred_region
      %58 = dma.done [#allocation6], 256
    $region29: #{tpu_custom_call.1} parent=1 // pred_fallthru
      _
    %v60 = vld [vmem:[#allocation2] sm:$0xf]
    %v61 = vld [vmem:[#allocation2 + $0x4] sm:$0xf]
    %v62 = vld [vmem:[#allocation5] sm:$0xff]
    %v63 = vld [vmem:[#allocation5 + $0x8] sm:$0xf]
    %v64 = vld [vmem:[#allocation5 + $0xc] sm:$0xff]
    %v65 = vld [vmem:[#allocation5 + $0x14] sm:$0xf]
    %v66 = vld [vmem:[#allocation5 + $0x18] sm:$0xff]
    %v67 = vld [vmem:[#allocation5 + $0x20] sm:$0xf]
    %v68 = vld [vmem:[#allocation5 + $0x24] sm:$0xff]
    %v69 = vld [vmem:[#allocation5 + $0x2c] sm:$0xf]
    %v70 = vld [vmem:[#allocation5 + $0x30] sm:$0xff]
    %v71 = vld [vmem:[#allocation5 + $0x38] sm:$0xf]
    %v72 = vld [vmem:[#allocation5 + $0x3c] sm:$0xff]
    %v73 = vld [vmem:[#allocation5 + $0x44] sm:$0xf]
    %v74 = vld [vmem:[#allocation5 + $0x48] sm:$0xff]
    %v75 = vld [vmem:[#allocation5 + $0x50] sm:$0xf]
    %v76 = vld [vmem:[#allocation5 + $0x54] sm:$0xff]
    %v77 = vld [vmem:[#allocation5 + $0x5c] sm:$0xf]
    %v78 = vld [vmem:[#allocation5 + $0x60] sm:$0xff]
    %v79 = vld [vmem:[#allocation5 + $0x68] sm:$0xf]
    %v80 = vld [vmem:[#allocation5 + $0x6c] sm:$0xff]
    %v81 = vld [vmem:[#allocation5 + $0x74] sm:$0xf]
    %v82 = vld [vmem:[#allocation5 + $0x78] sm:$0xff]
    %v83 = vld [vmem:[#allocation5 + $0x80] sm:$0xf]
    %v84 = vld [vmem:[#allocation5 + $0x84] sm:$0xff]
    %v85 = vld [vmem:[#allocation5 + $0x8c] sm:$0xf]
    %v86 = vld [vmem:[%s3] sm:$0x7]
    %v88 = vlaneseq
    %v89 = vshrl.u32 %v88, 7
    %v90 = vsub.s32 0, %v89
    %v91 = vrot.slane %v86, %v90
    %v92 = vlaneseq
    %v93 = vshrl.u32 %v92, 7
    %v94 = vsub.s32 1, %v93
    %v95 = vrot.slane %v86, %v94
    %v96 = vlaneseq
    %v97 = vshrl.u32 %v96, 7
    %v98 = vsub.s32 2, %v97
    %v99 = vrot.slane %v86, %v98
    %v105 = vunpack.c.l.b16 %v60
    %v106 = vunpack.c.l.b16 %v61
    %v107 = vpack.c.b16 %v106, %v105
    %v132 = vunpack.c.l.b16 %v62
    %v133 = vunpack.c.h.b16 %v62
    %v134 = vunpack.c.l.b16 %v63
    %v135 = vunpack.c.l.b16 %v64
    %v136 = vunpack.c.h.b16 %v64
    %v137 = vunpack.c.l.b16 %v65
    %v138 = vunpack.c.l.b16 %v66
    %v139 = vunpack.c.h.b16 %v66
    %v140 = vunpack.c.l.b16 %v67
    %v141 = vunpack.c.l.b16 %v68
    %v142 = vunpack.c.h.b16 %v68
    %v143 = vunpack.c.l.b16 %v69
    %v144 = vunpack.c.l.b16 %v70
    %v145 = vunpack.c.h.b16 %v70
    %v146 = vunpack.c.l.b16 %v71
    %v147 = vunpack.c.l.b16 %v72
    %v148 = vunpack.c.h.b16 %v72
    %v149 = vunpack.c.l.b16 %v73
    %v150 = vunpack.c.l.b16 %v74
    %v151 = vunpack.c.h.b16 %v74
    %v152 = vunpack.c.l.b16 %v75
    %v153 = vunpack.c.l.b16 %v76
    %v154 = vunpack.c.h.b16 %v76
    %v155 = vunpack.c.l.b16 %v77
    %v156 = vunpack.c.l.b16 %v78
    %v157 = vunpack.c.h.b16 %v78
    %v158 = vunpack.c.l.b16 %v79
    %v159 = vunpack.c.l.b16 %v80
    %v160 = vunpack.c.h.b16 %v80
    %v161 = vunpack.c.l.b16 %v81
    %v162 = vunpack.c.l.b16 %v82
    %v163 = vunpack.c.h.b16 %v82
    %v164 = vunpack.c.l.b16 %v83
    %v165 = vunpack.c.l.b16 %v84
    %v166 = vunpack.c.h.b16 %v84
    %v167 = vunpack.c.l.b16 %v85
    %v168 = vpack.c.b16 %v135, %v132
    %v169 = vpack.c.b16 %v136, %v133
    %v170 = vpack.c.b16 %v137, %v134
    %v171 = vpack.c.b16 %v141, %v138
    %v172 = vpack.c.b16 %v142, %v139
    %v173 = vpack.c.b16 %v143, %v140
    %v174 = vpack.c.b16 %v147, %v144
    %v175 = vpack.c.b16 %v148, %v145
    %v176 = vpack.c.b16 %v149, %v146
    %v177 = vpack.c.b16 %v153, %v150
    %v178 = vpack.c.b16 %v154, %v151
    %v179 = vpack.c.b16 %v155, %v152
    %v180 = vpack.c.b16 %v159, %v156
    %v181 = vpack.c.b16 %v160, %v157
    %v182 = vpack.c.b16 %v161, %v158
    %v183 = vpack.c.b16 %v165, %v162
    %v184 = vpack.c.b16 %v166, %v163
    %v185 = vpack.c.b16 %v167, %v164
    %vm204 = vcmask 785408
    %v206 = vsel %vm204, %v107, 0
    %208 = vmatprep.subr.bf16.mxu0 %v169
    %209 = vmatpush1.bf16.msra.mxu0 %v168
    %210 = vmatprep.subr.bf16.mxu0 %v172
    %211 = vmatpush1.bf16.msra.mxu0 %v171
    %212 = vmatprep.subr.bf16.mxu0 %v175
    %213 = vmatpush1.bf16.msra.mxu0 %v174
    %214 = vmatprep.subr.bf16.mxu0 %v178
    %215 = vmatpush1.bf16.msra.mxu0 %v177
    %216 = vmatprep.subr.bf16.mxu0 %v181
    %217 = vmatpush1.bf16.msra.mxu0 %v180
    %218 = vmatprep.subr.bf16.mxu0 %v184
    %219 = vmatpush1.bf16.msra.mxu0 %v183
    %220 = vmatprep.subr.bf16.mxu0 0
    %221 = vmatpush1.bf16.msra.mxu0 0
    %222 = vmatprep.subr.bf16.mxu0 0
    %223 = vmatpush1.bf16.msra.mxu0 0
    %224 = vmatprep.subr.bf16.mxu0 0
    %225 = vmatpush1.bf16.msra.mxu0 0
    %226 = vmatprep.subr.bf16.mxu0 0
    %227 = vmatpush1.bf16.msra.mxu0 0
    %228 = vmatprep.subr.bf16.mxu0 0
    %229 = vmatpush1.bf16.msra.mxu0 0
    %230 = vmatprep.subr.bf16.mxu0 0
    %231 = vmatpush1.bf16.msra.mxu0 0
    %232 = vmatprep.subr.bf16.mxu0 0
    %233 = vmatpush1.bf16.msra.mxu0 0
    %234 = vmatprep.subr.bf16.mxu0 0
    %235 = vmatpush1.bf16.msra.mxu0 0
    %236 = vmatprep.subr.bf16.mxu0 0
    %237 = vmatpush1.bf16.msra.mxu0 0
    %238 = vmatprep.subr.bf16.mxu0 0
    %239 = vmatpush1.bf16.msra.mxu0 0
    %240 = vmatprep.mubr.bf16.mxu0 0
    %241 = vmatmul.mubr.bf16.gmra.mrb[0].mxu0 %v206
    %v242 = vpop.f32.mrb[0].mxu0
    %v243 = vadd.f32 %v91, %v242
    %v244 = vpop.f32.mrb[0].mxu0
    %v245 = vadd.f32 %v95, %v244
    %v246 = vpop.f32.mrb[0].mxu0
    %v247 = vadd.f32 %v91, %v246
    %v248 = vpop.f32.mrb[0].mxu0
    %v249 = vadd.f32 %v95, %v248
    %250 = vdwg.mxu0
    %251 = vmatprep.subr.bf16.mxu0 0
    %252 = vmatpush1.bf16.msra.mxu0 %v170
    %253 = vmatprep.subr.bf16.mxu0 0
    %254 = vmatpush1.bf16.msra.mxu0 %v173
    %255 = vmatprep.subr.bf16.mxu0 0
    %256 = vmatpush1.bf16.msra.mxu0 %v176
    %257 = vmatprep.subr.bf16.mxu0 0
    %258 = vmatpush1.bf16.msra.mxu0 %v179
    %259 = vmatprep.subr.bf16.mxu0 0
    %260 = vmatpush1.bf16.msra.mxu0 %v182
    %261 = vmatprep.subr.bf16.mxu0 0
    %262 = vmatpush1.bf16.msra.mxu0 %v185
    %263 = vmatprep.subr.bf16.mxu0 0
    %264 = vmatpush1.bf16.msra.mxu0 0
    %265 = vmatprep.subr.bf16.mxu0 0
    %266 = vmatpush1.bf16.msra.mxu0 0
    %267 = vmatprep.subr.bf16.mxu0 0
    %268 = vmatpush1.bf16.msra.mxu0 0
    %269 = vmatprep.subr.bf16.mxu0 0
    %270 = vmatpush1.bf16.msra.mxu0 0
    %271 = vmatprep.subr.bf16.mxu0 0
    %272 = vmatpush1.bf16.msra.mxu0 0
    %273 = vmatprep.subr.bf16.mxu0 0
    %274 = vmatpush1.bf16.msra.mxu0 0
    %275 = vmatprep.subr.bf16.mxu0 0
    %276 = vmatpush1.bf16.msra.mxu0 0
    %277 = vmatprep.subr.bf16.mxu0 0
    %278 = vmatpush1.bf16.msra.mxu0 0
    %279 = vmatprep.subr.bf16.mxu0 0
    %280 = vmatpush1.bf16.msra.mxu0 0
    %281 = vmatprep.subr.bf16.mxu0 0
    %282 = vmatpush1.bf16.msra.mxu0 0
    %283 = vmatprep.mubr.bf16.mxu0 0
    %284 = vmatmul.mubr.bf16.gmra.mrb[0].mxu0 %v206
    %v285 = vpop.f32.mrb[0].mxu0
    %v286 = vadd.f32 %v99, %v285
    %v287 = vpop.f32.mrb[0].mxu0
    %v288 = vpop.f32.mrb[0].mxu0
    %v289 = vadd.f32 %v99, %v288
    %v290 = vpop.f32.mrb[0].mxu0
    %291 = vdwg.mxu0
    %v292 = vld [vmem:[#allocation7] sm:$0xf]
    %v293 = vld [vmem:[#allocation7 + $0x4] sm:$0xf]
    %v294 = vld [vmem:[#allocation7 + $0x8] sm:$0xf]
    %v295 = vld [vmem:[#allocation7 + $0xc] sm:$0xf]
    %v296 = vlaneseq
    %v297 = vand.u32 %v296, 127
    %vm298 = vcmp.ge.s32.totalorder %v297, 64
    %vm299 = vcmp.lt.s32.totalorder %v297, 96
    %vm300 = vmand %vm298, %vm299
    %v305 = vunpack.c.l.b16 %v292
    %v306 = vunpack.c.l.b16 %v293
    %v307 = vunpack.c.l.b16 %v294
    %v308 = vunpack.c.l.b16 %v295
    %v309 = vpack.c.b16 %v306, %v305
    %v310 = vpack.c.b16 %v308, %v307
    %vm313 = vcmask 261120
    %v315 = vsel %vm313, 0, 0
    %317 = vmatprep.subr.bf16.mxu0 0
    %318 = vmatpush1.bf16.msra.mxu0 %v309
    %319 = vmatprep.subr.bf16.mxu0 0
    %320 = vmatpush1.bf16.msra.mxu0 %v310
    %321 = vmatprep.subr.bf16.mxu0 0
    %322 = vmatpush1.bf16.msra.mxu0 0
    %323 = vmatprep.subr.bf16.mxu0 0
    %324 = vmatpush1.bf16.msra.mxu0 0
    %325 = vmatprep.subr.bf16.mxu0 0
    %326 = vmatpush1.bf16.msra.mxu0 0
    %327 = vmatprep.subr.bf16.mxu0 0
    %328 = vmatpush1.bf16.msra.mxu0 0
    %329 = vmatprep.subr.bf16.mxu0 0
    %330 = vmatpush1.bf16.msra.mxu0 0
    %331 = vmatprep.subr.bf16.mxu0 0
    %332 = vmatpush1.bf16.msra.mxu0 0
    %333 = vmatprep.subr.bf16.mxu0 0
    %334 = vmatpush1.bf16.msra.mxu0 0
    %335 = vmatprep.subr.bf16.mxu0 0
    %336 = vmatpush1.bf16.msra.mxu0 0
    %337 = vmatprep.subr.bf16.mxu0 0
    %338 = vmatpush1.bf16.msra.mxu0 0
    %339 = vmatprep.subr.bf16.mxu0 0
    %340 = vmatpush1.bf16.msra.mxu0 0
    %341 = vmatprep.subr.bf16.mxu0 0
    %342 = vmatpush1.bf16.msra.mxu0 0
    %343 = vmatprep.subr.bf16.mxu0 0
    %344 = vmatpush1.bf16.msra.mxu0 0
    %345 = vmatprep.subr.bf16.mxu0 0
    %346 = vmatpush1.bf16.msra.mxu0 0
    %347 = vmatprep.subr.bf16.mxu0 0
    %348 = vmatpush1.bf16.msra.mxu0 0
    %349 = vmatprep.mubr.bf16.mxu0 0
    %350 = vmatmul.mubr.bf16.gmra.mrb[0].mxu0 %v315
    %v351 = vpop.f32.mrb[0].mxu0
    %v352 = vadd.f32 0.0, %v351
    %v353 = vpop.f32.mrb[0].mxu0
    %v354 = vpop.f32.mrb[0].mxu0
    %v355 = vadd.f32 0.0, %v354
    %v356 = vpop.f32.mrb[0].mxu0
    %357 = vdwg.mxu0
    %v358 = vadd.f32 %v243, %v352
    %v359 = vadd.f32 %v247, %v355
    %v360 = vxor.u32 %v358, 2147483648
    %v361 = vxor.u32 %v359, 2147483648
    %v362 = vmul.f32 %v360, 1.442695
    %v363 = vpow.pop %v362
    %v364 = vmul.f32 %v361, 1.442695
    %v365 = vpow.pop %v364
    %v366 = vadd.f32 %v363, 1.0
    %v367 = vadd.f32 %v365, 1.0
    %v368 = vrcp.pop %v366
    %v369 = vmul.f32 1.0, %v368
    %v370 = vrcp.pop %v367
    %v371 = vmul.f32 1.0, %v370
    %v372 = vmul.f32 %v369, 2.0
    %v373 = vmul.f32 %v371, 2.0
    %v374 = vsub.f32 %v372, 1.0
    %v375 = vsub.f32 %v373, 1.0
    %v376 = vsel %vm300, %v374, %v369
    %v377 = vsel %vm300, %v375, %v371
    %v378 = vmul.f32 %v376, 0.0
    %v379 = vmul.f32 %v377, 0.0
    %382 = vrot.lane.b32.xlu0 %v376, 64
    %v383 = vpop.permute.xlu0 %382
    %384 = vrot.lane.b32.xlu0 %v377, 64
    %v385 = vpop.permute.xlu0 %384
    %v388 = vmul.f32 %v376, %v383
    %v389 = vmul.f32 %v377, %v385
    %392 = vrot.lane.b32.xlu0 %v388, 32
    %v393 = vpop.permute.xlu0 %392
    %394 = vrot.lane.b32.xlu0 %v389, 32
    %v395 = vpop.permute.xlu0 %394
    %v398 = vadd.f32 %v378, %v393
    %v399 = vadd.f32 %v379, %v395
    %v400 = vtanh.pop %v398
    %v401 = vtanh.pop %v399
    %404 = vrot.lane.b32.xlu0 %v400, 64
    %v405 = vpop.permute.xlu0 %404
    %406 = vrot.lane.b32.xlu0 %v401, 64
    %v407 = vpop.permute.xlu0 %406
    %v410 = vmul.f32 %v376, %v405
    %v411 = vmul.f32 %v377, %v407
    %v412 = vadd.f32 %v410, 0.0
    %v413 = vadd.f32 %v411, 0.0
    %v414 = vpack.c.bf16 %v411, %v410
    %416 = vrot.lane.b32.xlu0 %v414, 32
    %v417 = vpop.permute.xlu0 %416
    %v419 = vsel %vm313, %v417, 0
    %421 = vmatprep.subr.bf16.mxu0 0
    %422 = vmatpush1.bf16.msra.mxu0 %v309
    %423 = vmatprep.subr.bf16.mxu0 0
    %424 = vmatpush1.bf16.msra.mxu0 %v310
    %425 = vmatprep.subr.bf16.mxu0 0
    %426 = vmatpush1.bf16.msra.mxu0 0
    %427 = vmatprep.subr.bf16.mxu0 0
    %428 = vmatpush1.bf16.msra.mxu0 0
    %429 = vmatprep.subr.bf16.mxu0 0
    %430 = vmatpush1.bf16.msra.mxu0 0
    %431 = vmatprep.subr.bf16.mxu0 0
    %432 = vmatpush1.bf16.msra.mxu0 0
    %433 = vmatprep.subr.bf16.mxu0 0
    %434 = vmatpush1.bf16.msra.mxu0 0
    %435 = vmatprep.subr.bf16.mxu0 0
    %436 = vmatpush1.bf16.msra.mxu0 0
    %437 = vmatprep.subr.bf16.mxu0 0
    %438 = vmatpush1.bf16.msra.mxu0 0
    %439 = vmatprep.subr.bf16.mxu0 0
    %440 = vmatpush1.bf16.msra.mxu0 0
    %441 = vmatprep.subr.bf16.mxu0 0
    %442 = vmatpush1.bf16.msra.mxu0 0
    %443 = vmatprep.subr.bf16.mxu0 0
    %444 = vmatpush1.bf16.msra.mxu0 0
    %445 = vmatprep.subr.bf16.mxu0 0
    %446 = vmatpush1.bf16.msra.mxu0 0
    %447 = vmatprep.subr.bf16.mxu0 0
    %448 = vmatpush1.bf16.msra.mxu0 0
    %449 = vmatprep.subr.bf16.mxu0 0
    %450 = vmatpush1.bf16.msra.mxu0 0
    %451 = vmatprep.subr.bf16.mxu0 0
    %452 = vmatpush1.bf16.msra.mxu0 0
    %453 = vmatprep.mubr.bf16.mxu0 0
    %454 = vmatmul.mubr.bf16.gmra.mrb[0].mxu0 %v419
    %v455 = vpop.f32.mrb[0].mxu0
    %v456 = vadd.f32 0.0, %v455
    %v457 = vpop.f32.mrb[0].mxu0
    %v458 = vpop.f32.mrb[0].mxu0
    %v459 = vadd.f32 0.0, %v458
    %v460 = vpop.f32.mrb[0].mxu0
    %461 = vdwg.mxu0
    %v462 = vadd.f32 %v245, %v456
    %v463 = vadd.f32 %v249, %v459
    %v464 = vxor.u32 %v462, 2147483648
    %v465 = vxor.u32 %v463, 2147483648
    %v466 = vmul.f32 %v464, 1.442695
    %v467 = vpow.pop %v466
    %v468 = vmul.f32 %v465, 1.442695
    %v469 = vpow.pop %v468
    %v470 = vadd.f32 %v467, 1.0
    %v471 = vadd.f32 %v469, 1.0
    %v472 = vrcp.pop %v470
    %v473 = vmul.f32 1.0, %v472
    %v474 = vrcp.pop %v471
    %v475 = vmul.f32 1.0, %v474
    %v476 = vmul.f32 %v473, 2.0
    %v477 = vmul.f32 %v475, 2.0
    %v478 = vsub.f32 %v476, 1.0
    %v479 = vsub.f32 %v477, 1.0
    %v480 = vsel %vm300, %v478, %v473
    %v481 = vsel %vm300, %v479, %v475
    %v482 = vmul.f32 %v480, %v398
    %v483 = vmul.f32 %v481, %v399
    %486 = vrot.lane.b32.xlu0 %v480, 64
    %v487 = vpop.permute.xlu0 %486
    %488 = vrot.lane.b32.xlu0 %v481, 64
    %v489 = vpop.permute.xlu0 %488
    %v492 = vmul.f32 %v480, %v487
    %v493 = vmul.f32 %v481, %v489
    %496 = vrot.lane.b32.xlu0 %v492, 32
    %v497 = vpop.permute.xlu0 %496
    %498 = vrot.lane.b32.xlu0 %v493, 32
    %v499 = vpop.permute.xlu0 %498
    %v502 = vadd.f32 %v482, %v497
    %v503 = vadd.f32 %v483, %v499
    %v504 = vtanh.pop %v502
    %v505 = vtanh.pop %v503
    %508 = vrot.lane.b32.xlu0 %v504, 64
    %v509 = vpop.permute.xlu0 %508
    %510 = vrot.lane.b32.xlu0 %v505, 64
    %v511 = vpop.permute.xlu0 %510
    %v514 = vmul.f32 %v480, %v509
    %v515 = vmul.f32 %v481, %v511
    %v516 = vadd.f32 %v412, %v514
    %v517 = vadd.f32 %v413, %v515
    %v518 = vpack.c.bf16 %v515, %v514
    %520 = vrot.lane.b32.xlu0 %v518, 32
    %v521 = vpop.permute.xlu0 %520
    %v523 = vsel %vm313, %v521, 0
    %525 = vmatprep.subr.bf16.mxu0 0
    %526 = vmatpush1.bf16.msra.mxu0 %v309
    %527 = vmatprep.subr.bf16.mxu0 0
    %528 = vmatpush1.bf16.msra.mxu0 %v310
    %529 = vmatprep.subr.bf16.mxu0 0
    %530 = vmatpush1.bf16.msra.mxu0 0
    %531 = vmatprep.subr.bf16.mxu0 0
    %532 = vmatpush1.bf16.msra.mxu0 0
    %533 = vmatprep.subr.bf16.mxu0 0
    %534 = vmatpush1.bf16.msra.mxu0 0
    %535 = vmatprep.subr.bf16.mxu0 0
    %536 = vmatpush1.bf16.msra.mxu0 0
    %537 = vmatprep.subr.bf16.mxu0 0
    %538 = vmatpush1.bf16.msra.mxu0 0
    %539 = vmatprep.subr.bf16.mxu0 0
    %540 = vmatpush1.bf16.msra.mxu0 0
    %541 = vmatprep.subr.bf16.mxu0 0
    %542 = vmatpush1.bf16.msra.mxu0 0
    %543 = vmatprep.subr.bf16.mxu0 0
    %544 = vmatpush1.bf16.msra.mxu0 0
    %545 = vmatprep.subr.bf16.mxu0 0
    %546 = vmatpush1.bf16.msra.mxu0 0
    %547 = vmatprep.subr.bf16.mxu0 0
    %548 = vmatpush1.bf16.msra.mxu0 0
    %549 = vmatprep.subr.bf16.mxu0 0
    %550 = vmatpush1.bf16.msra.mxu0 0
    %551 = vmatprep.subr.bf16.mxu0 0
    %552 = vmatpush1.bf16.msra.mxu0 0
    %553 = vmatprep.subr.bf16.mxu0 0
    %554 = vmatpush1.bf16.msra.mxu0 0
    %555 = vmatprep.subr.bf16.mxu0 0
    %556 = vmatpush1.bf16.msra.mxu0 0
    %557 = vmatprep.mubr.bf16.mxu0 0
    %558 = vmatmul.mubr.bf16.gmra.mrb[0].mxu0 %v523
    %v559 = vpop.f32.mrb[0].mxu0
    %v560 = vadd.f32 0.0, %v559
    %v561 = vpop.f32.mrb[0].mxu0
    %v562 = vpop.f32.mrb[0].mxu0
    %v563 = vadd.f32 0.0, %v562
    %v564 = vpop.f32.mrb[0].mxu0
    %565 = vdwg.mxu0
    %v566 = vadd.f32 %v286, %v560
    %v567 = vadd.f32 %v289, %v563
    %v568 = vxor.u32 %v566, 2147483648
    %v569 = vxor.u32 %v567, 2147483648
    %v570 = vmul.f32 %v568, 1.442695
    %v571 = vpow.pop %v570
    %v572 = vmul.f32 %v569, 1.442695
    %v573 = vpow.pop %v572
    %v574 = vadd.f32 %v571, 1.0
    %v575 = vadd.f32 %v573, 1.0
    %v576 = vrcp.pop %v574
    %v577 = vmul.f32 1.0, %v576
    %v578 = vrcp.pop %v575
    %v579 = vmul.f32 1.0, %v578
    %v580 = vmul.f32 %v577, 2.0
    %v581 = vmul.f32 %v579, 2.0
    %v582 = vsub.f32 %v580, 1.0
    %v583 = vsub.f32 %v581, 1.0
    %v584 = vsel %vm300, %v582, %v577
    %v585 = vsel %vm300, %v583, %v579
    %v586 = vmul.f32 %v584, %v502
    %v587 = vmul.f32 %v585, %v503
    %590 = vrot.lane.b32.xlu0 %v584, 64
    %v591 = vpop.permute.xlu0 %590
    %592 = vrot.lane.b32.xlu0 %v585, 64
    %v593 = vpop.permute.xlu0 %592
    %v596 = vmul.f32 %v584, %v591
    %v597 = vmul.f32 %v585, %v593
    %600 = vrot.lane.b32.xlu0 %v596, 32
    %v601 = vpop.permute.xlu0 %600
    %602 = vrot.lane.b32.xlu0 %v597, 32
    %v603 = vpop.permute.xlu0 %602
    %v606 = vadd.f32 %v586, %v601
    %v607 = vadd.f32 %v587, %v603
    %v608 = vtanh.pop %v606
    %v609 = vtanh.pop %v607
    %612 = vrot.lane.b32.xlu0 %v608, 64
    %v613 = vpop.permute.xlu0 %612
    %614 = vrot.lane.b32.xlu0 %v609, 64
    %v615 = vpop.permute.xlu0 %614
    %v618 = vmul.f32 %v584, %v613
    %v619 = vmul.f32 %v585, %v615
    %v620 = vadd.f32 %v516, %v618
    %v621 = vadd.f32 %v517, %v619
    %v622 = vmul.f32 %v620, 0.33333334
    %v623 = vmul.f32 %v621, 0.33333334
    %626 = vrot.lane.b32.xlu0 %v622, 32
    %v627 = vpop.permute.xlu0 %626
    %628 = vrot.lane.b32.xlu0 %v623, 32
    %v629 = vpop.permute.xlu0 %628
    %632 = vst.msk [vmem:[#allocation8] sm:$0xff] %vm313, %v627
    %633 = vst.msk [vmem:[#allocation8 + $0x8] sm:$0xff] %vm313, %v629
    // Predicated region
    $region30: #{tpu_custom_call.1} parent=1 // pred_check
      _
    $region31: #{tpu_custom_call.1} parent=1 // pred_check_branch
      %635 = sbr.rel (0) target = $region33
    $region32: #{tpu_custom_call.1} parent=1 // pred_region
      %s637 = ssub.s32 256, 256
      %638 = vsyncadd [#allocation4], %s637
      %s639 = sshll.u32 [#allocation8], 4
      %s640 = int_to_ptr.vmem [resolvable:$true] %s639
      %645 = dma.vmem_to_hbm [thread:$0]  %s640, 256, %s4, [#allocation4], 128, 128, 8
    $region33: #{tpu_custom_call.1} parent=1 // pred_fallthru
      _
    // Predicated region
    $region34: #{tpu_custom_call.1} parent=1 // pred_check
      _
    $region35: #{tpu_custom_call.1} parent=1 // pred_check_branch
      %647 = sbr.rel (0) target = $region37
    $region36: #{tpu_custom_call.1} parent=1 // pred_region
      %648 = dma.done [#allocation4], 256
    $region37: #{tpu_custom_call.1} parent=1 // pred_fallthru
      _
    %649 = vsyncpa [#allocation3], 1
    %650 = vsyncpa [#allocation6], 1
    %651 = vsyncpa [#allocation4], 1

</llo_original>
